<compile_context>
chip_gen: v7x
topology: tpu7x:2x2x1
jax: 0.10.0
libtpu: 0.0.40
codegen_flags: <defaults>
</compile_context>

<pallas_src>
import functools

import jax
import jax.numpy as jnp
from jax import lax
from jax.experimental import pallas as pl
from jax.experimental.pallas import tpu as pltpu


# ----------------------------------------------------------------------------
# Kernel A: fused select -> dilate -> bbox over the whole video (grid=(T,))
# ----------------------------------------------------------------------------
def select_dilate_bbox_kernel(key_idx_ref,           # scalar prefetch (SMEM), (1,) int32
                              masks_ref,             # (1, N, H, W) bf16 VMEM block
                              mask_out_ref,          # (1, H, W) f32 VMEM block
                              box_out_ref,           # (T, 4) int32, SMEM (resident)
                              ref_scratch,           # (H, W) f32 VMEM scratch (persists)
                              prev_box_scratch,      # (4,) int32 SMEM scratch (persists)
                              *, ksize):
    t = pl.program_id(0)
    _, N, H, W = masks_ref.shape

    # Tracker stand-in: box[t] = bbox(mask[t-1]) for t>=1 (carried in SMEM).
    @pl.when(t > 0)
    def _():
        for j in range(4):
            box_out_ref[t, j] = prev_box_scratch[j]

    # Initialize the resident reference mask on the key frame.
    @pl.when(t == 0)
    def _():
        ref_scratch[...] = jnp.zeros_like(ref_scratch)

    masks = masks_ref[0].astype(jnp.float32)          # (N, H, W)
    ref = ref_scratch[...]                            # (H, W)

    # --- selection -----------------------------------------------------------
    # t>0: argmin over candidates of SSE vs ref (== argmin MSE, no divide).
    # t==0: index precomputed in the wrapper (given idx or score argmax),
    #        delivered via SMEM scalar prefetch.
    best_i = jnp.int32(0)
    best_m = jnp.sum(jnp.square(masks[0] - ref))
    for n in range(1, N):
        m_n = jnp.sum(jnp.square(masks[n] - ref))
        better = m_n < best_m                         # strict '<' -> first argmin
        best_i = jnp.where(better, jnp.int32(n), best_i)
        best_m = jnp.where(better, m_n, best_m)
    idx = jnp.where(t == 0, key_idx_ref[0], best_i)

    # One-hot combine from the already-loaded candidates (no dynamic re-gather).
    sel = jnp.zeros((H, W), jnp.float32)
    for n in range(N):
        sel = sel + masks[n] * (idx == n).astype(jnp.float32)

    # --- separable binary dilation (zero border, == cv2.dilate) --------------
    # Shifted copies via XLU rolls; wrapped lanes/sublanes masked out with iota.
    col_i = lax.broadcasted_iota(jnp.int32, (H, W), 1)
    row_i = lax.broadcasted_iota(jnp.int32, (H, W), 0)
    r = ksize // 2
    acc = sel
    for off in range(-r, ksize - r):                  # horizontal pass
        if off == 0:
            continue
        s = -off                                      # out[i] = in[i - s]
        shifted = pltpu.roll(sel, shift=s % W, axis=1)
        if s > 0:
            shifted = jnp.where(col_i >= s, shifted, 0.0)
        else:
            shifted = jnp.where(col_i < W + s, shifted, 0.0)
        acc = jnp.maximum(acc, shifted)
    dil = acc
    for off in range(-r, ksize - r):                  # vertical pass
        if off == 0:
            continue
        s = -off
        shifted = pltpu.roll(acc, shift=s % H, axis=0)
        if s > 0:
            shifted = jnp.where(row_i >= s, shifted, 0.0)
        else:
            shifted = jnp.where(row_i < H + s, shifted, 0.0)
        dil = jnp.maximum(dil, shifted)

    mask_out_ref[0, :, :] = dil
    ref_scratch[...] = dil                            # becomes next frame's ref

    # --- bounding rect (== cv2.boundingRect) while mask is still in vregs ----
    col_has = jnp.max(dil, axis=0, keepdims=True) > 0.0      # (1, W)
    row_has = jnp.max(dil, axis=1, keepdims=True) > 0.0      # (H, 1)
    cidx = lax.broadcasted_iota(jnp.int32, (1, W), 1)
    ridx = lax.broadcasted_iota(jnp.int32, (H, 1), 0)
    minx = jnp.min(jnp.where(col_has, cidx, W))
    maxx = jnp.max(jnp.where(col_has, cidx, -1))
    miny = jnp.min(jnp.where(row_has, ridx, H))
    maxy = jnp.max(jnp.where(row_has, ridx, -1))
    any_on = jnp.max(dil) > 0.0
    bx = jnp.where(any_on, minx, 0)
    by = jnp.where(any_on, miny, 0)
    bw = jnp.where(any_on, maxx - minx + 1, 0)
    bh = jnp.where(any_on, maxy - miny + 1, 0)
    prev_box_scratch[0] = bx
    prev_box_scratch[1] = by
    prev_box_scratch[2] = bw
    prev_box_scratch[3] = bh

    @pl.when(t == 0)
    def _():
        box_out_ref[0, 0] = bx
        box_out_ref[0, 1] = by
        box_out_ref[0, 2] = bw
        box_out_ref[0, 3] = bh


def _select_dilate_bbox(cand_masks_bf16, key_idx, ksize):
    T, N, H, W = cand_masks_bf16.shape
    bytes_accessed = T * N * H * W * 2 + T * H * W * 4 + T * 4 * 4 + 4
    flops = T * H * W * (3 * N + 4 * (ksize - 1) + 8)
    return pl.pallas_call(
        functools.partial(select_dilate_bbox_kernel, ksize=ksize),
        out_shape=(jax.ShapeDtypeStruct((T, H, W), jnp.float32),
                   jax.ShapeDtypeStruct((T, 4), jnp.int32)),
        grid_spec=pltpu.PrefetchScalarGridSpec(
            num_scalar_prefetch=1,
            grid=(T,),
            in_specs=[pl.BlockSpec((1, N, H, W), lambda t, kidx: (t, 0, 0, 0))],
            out_specs=(pl.BlockSpec((1, H, W), lambda t, kidx: (t, 0, 0)),
                       pl.BlockSpec(memory_space=pltpu.MemorySpace.SMEM)),
            scratch_shapes=[pltpu.VMEM((H, W), jnp.float32),
                            pltpu.SMEM((4,), jnp.int32)],
        ),
        compiler_params=pltpu.CompilerParams(
            dimension_semantics=("arbitrary",),      # sequential: ref mask carried
            vmem_limit_bytes=32 * 1024 * 1024,
        ),
        cost_estimate=pl.CostEstimate(flops=flops, transcendentals=0,
                                      bytes_accessed=bytes_accessed),
    )(key_idx, cand_masks_bf16)


# ----------------------------------------------------------------------------
# Kernel B: batched inpaint composite (stand-in for STTN), grid over frames
# ----------------------------------------------------------------------------
def inpaint_kernel(frame_ref, mask_ref, out_ref):
    frame = frame_ref[0]                              # (C, H, W)
    mask = mask_ref[0]                                # (H, W)
    keep = 1.0 - mask
    masked = frame * keep[None, :, :]
    sums = jnp.sum(jnp.sum(masked, axis=2), axis=1, keepdims=True)   # (C, 1)
    cnt = jnp.maximum(jnp.sum(keep), 1.0)
    fill = (sums / cnt)[:, :, None]                   # (C, 1, 1)
    out_ref[0, :, :, :] = masked + fill * mask[None, :, :]


def _inpaint_all(frames, masks):
    T, C, H, W = frames.shape
    # TODO(synk): at real resolutions (e.g. 1080p) tile the H axis as well so a
    # block fits v7x's 64 MiB VMEM; full-frame blocks are fine at demo sizes.
    bytes_accessed = T * (2 * C * H * W * 4 + H * W * 4)
    flops = T * C * H * W * 5
    return pl.pallas_call(
        inpaint_kernel,
        out_shape=jax.ShapeDtypeStruct((T, C, H, W), jnp.float32),
        grid_spec=pltpu.PrefetchScalarGridSpec(
            num_scalar_prefetch=0,
            grid=(T,),
            in_specs=[pl.BlockSpec((1, C, H, W), lambda t: (t, 0, 0, 0)),
                      pl.BlockSpec((1, H, W), lambda t: (t, 0, 0))],
            out_specs=pl.BlockSpec((1, C, H, W), lambda t: (t, 0, 0, 0)),
        ),
        compiler_params=pltpu.CompilerParams(
            dimension_semantics=("parallel",),        # frames independent; 2x on v7x dual-TC
            vmem_limit_bytes=32 * 1024 * 1024,
        ),
        cost_estimate=pl.CostEstimate(flops=flops, transcendentals=0,
                                      bytes_accessed=bytes_accessed),
    )(frames.astype(jnp.float32), masks)


# ----------------------------------------------------------------------------
# Forward pass mirroring RemoveAnythingVideo.forward
# ----------------------------------------------------------------------------
def remove_anything_video_forward(frames, cand_masks, cand_scores,
                                  key_frame_mask_idx=None, dilate_kernel_size=15):
    """frames: (T,C,H,W) f32 0-255; cand_masks: (T,N,H,W) {0,1}; cand_scores: (T,N)."""
    T, C, H, W = frames.shape

    # Key-frame selection index: given idx, else score argmax (scores only
    # matter for the key frame; all later frames select by MSE vs ref mask).
    if key_frame_mask_idx is not None:
        key_idx = jnp.full((1,), int(key_frame_mask_idx), dtype=jnp.int32)
    else:
        key_idx = jnp.argmax(cand_scores[0]).astype(jnp.int32).reshape(1)

    ksize = dilate_kernel_size if dilate_kernel_size is not None else 1  # 1 == no dilation

    # Fused per-frame select -> dilate -> bbox; ref mask stays in VMEM scratch.
    all_mask, all_box = _select_dilate_bbox(cand_masks.astype(jnp.bfloat16), key_idx, ksize)

    # Batched inpaint over all frames.
    all_frame = _inpaint_all(frames, all_mask)

    return all_frame, all_mask, all_box


if __name__ == "__main__":
    key = jax.random.PRNGKey(0)
    T, N, C, H, W = 4, 3, 3, 16, 128    # W multiple of 128, H multiple of 8 (lane-dense)
    k1, k2, k3 = jax.random.split(key, 3)

    frames = jax.random.uniform(k1, (T, C, H, W), jnp.float32) * 255.0
    cand_masks = (jax.random.uniform(k2, (T, N, H, W), jnp.float32) > 0.8).astype(jnp.float32)
    cand_scores = jax.random.uniform(k3, (T, N), jnp.float32)

    out_frames, out_masks, out_boxes = remove_anything_video_forward(
        frames, cand_masks, cand_scores, key_frame_mask_idx=None, dilate_kernel_size=5)

    jax.block_until_ready((out_frames, out_masks, out_boxes))
    assert out_frames.shape == (T, C, H, W)
    assert out_masks.shape == (T, H, W)
    assert out_boxes.shape == (T, 4)
    # masks stay binary after dilation; boxes stay inside the frame
    assert bool(jnp.all((out_masks == 0.0) | (out_masks == 1.0)))
    assert bool(jnp.all(out_boxes >= 0))
    assert bool(jnp.all(out_boxes[:, 0] + out_boxes[:, 2] <= W))
    assert bool(jnp.all(out_boxes[:, 1] + out_boxes[:, 3] <= H))
    print("KERNEL_OK")
</pallas_src>

<mosaic_0001>
module attributes {stable_mosaic.version = 11 : i64} {
  func.func @select_dilate_bbox_kernel(%arg0: i32, %arg1: memref<1xi32, #tpu.memory_space<smem>>, %arg2: memref<1x3x16x128xbf16, #tpu.memory_space<vmem>>, %arg3: memref<1x16x128xf32, #tpu.memory_space<vmem>>, %arg4: memref<4x4xi32, #tpu.memory_space<smem>>, %arg5: memref<16x128xf32, #tpu.memory_space<vmem>>, %arg6: memref<4xi32, #tpu.memory_space<smem>>) attributes {dimension_semantics = [#tpu.dimension_semantics<arbitrary>], iteration_bounds = array<i64: 4>, scalar_prefetch = 1 : i64, scratch_operands = 2 : i64, tpu.core_type = #tpu.core_type<tc>, window_params = [{transform_indices = @transform_0, window_bounds = array<i64: 1, 3, 16, 128>}, {transform_indices = @transform_1, window_bounds = array<i64: 1, 16, 128>}, {transform_indices = @transform_2, window_bounds = array<i64: 4, 4>}]} {
    %c0_i32 = arith.constant 0 : i32
    %0 = arith.cmpi sgt, %arg0, %c0_i32 : i32
    %1 = arith.extui %0 : i1 to i32
    %c0_i32_0 = arith.constant 0 : i32
    %2 = arith.cmpi ne, %1, %c0_i32_0 : i32
    scf.if %2 {
      %c0_62 = arith.constant 0 : index
      %175 = memref.load %arg6[%c0_62] : memref<4xi32, #tpu.memory_space<smem>>
      %176 = arith.index_cast %arg0 : i32 to index
      %c0_63 = arith.constant 0 : index
      %177 = memref.load %arg4[%176, %c0_63] : memref<4x4xi32, #tpu.memory_space<smem>>
      memref.store %175, %arg4[%176, %c0_63] : memref<4x4xi32, #tpu.memory_space<smem>>
      %c1_64 = arith.constant 1 : index
      %178 = memref.load %arg6[%c1_64] : memref<4xi32, #tpu.memory_space<smem>>
      %179 = arith.index_cast %arg0 : i32 to index
      %c1_65 = arith.constant 1 : index
      %180 = memref.load %arg4[%179, %c1_65] : memref<4x4xi32, #tpu.memory_space<smem>>
      memref.store %178, %arg4[%179, %c1_65] : memref<4x4xi32, #tpu.memory_space<smem>>
      %c2_66 = arith.constant 2 : index
      %181 = memref.load %arg6[%c2_66] : memref<4xi32, #tpu.memory_space<smem>>
      %182 = arith.index_cast %arg0 : i32 to index
      %c2_67 = arith.constant 2 : index
      %183 = memref.load %arg4[%182, %c2_67] : memref<4x4xi32, #tpu.memory_space<smem>>
      memref.store %181, %arg4[%182, %c2_67] : memref<4x4xi32, #tpu.memory_space<smem>>
      %c3_68 = arith.constant 3 : index
      %184 = memref.load %arg6[%c3_68] : memref<4xi32, #tpu.memory_space<smem>>
      %185 = arith.index_cast %arg0 : i32 to index
      %c3_69 = arith.constant 3 : index
      %186 = memref.load %arg4[%185, %c3_69] : memref<4x4xi32, #tpu.memory_space<smem>>
      memref.store %184, %arg4[%185, %c3_69] : memref<4x4xi32, #tpu.memory_space<smem>>
    } else {
    }
    %c0_i32_1 = arith.constant 0 : i32
    %3 = arith.cmpi eq, %arg0, %c0_i32_1 : i32
    %4 = arith.extui %3 : i1 to i32
    %c0_i32_2 = arith.constant 0 : i32
    %5 = arith.cmpi ne, %4, %c0_i32_2 : i32
    scf.if %5 {
      %cst_62 = arith.constant 0.000000e+00 : f32
      %175 = vector.broadcast %cst_62 : f32 to vector<16x128xf32>
      %c0_63 = arith.constant 0 : index
      %c0_64 = arith.constant 0 : index
      %176 = vector.load %arg5[%c0_63, %c0_64] : memref<16x128xf32, #tpu.memory_space<vmem>>, vector<16x128xf32>
      tpu.vector_store %arg5[%c0_63, %c0_64], %175 {strides = array<i32>} : memref<16x128xf32, #tpu.memory_space<vmem>>, vector<16x128xf32>,
    } else {
    }
    %c0 = arith.constant 0 : index
    %c0_3 = arith.constant 0 : index
    %c0_4 = arith.constant 0 : index
    %c0_5 = arith.constant 0 : index
    %6 = vector.load %arg2[%c0, %c0_3, %c0_4, %c0_5] : memref<1x3x16x128xbf16, #tpu.memory_space<vmem>>, vector<1x3x16x128xbf16>
    %7 = vector.shape_cast %6 : vector<1x3x16x128xbf16> to vector<3x16x128xbf16>
    %8 = arith.extf %7 : vector<3x16x128xbf16> to vector<3x16x128xf32>
    %c0_6 = arith.constant 0 : index
    %c0_7 = arith.constant 0 : index
    %9 = vector.load %arg5[%c0_6, %c0_7] : memref<16x128xf32, #tpu.memory_space<vmem>>, vector<16x128xf32>
    %10 = vector.extract_strided_slice %8 {offsets = [0, 0, 0], sizes = [1, 16, 128], strides = [1, 1, 1]} : vector<3x16x128xf32> to vector<1x16x128xf32>
    %11 = vector.shape_cast %10 : vector<1x16x128xf32> to vector<16x128xf32>
    %12 = arith.subf %11, %9 : vector<16x128xf32>
    %13 = arith.mulf %12, %12 : vector<16x128xf32>
    %14 = vector.shape_cast %13 : vector<16x128xf32> to vector<1x16x128xf32>
    %cst = arith.constant dense<0.000000e+00> : vector<1xf32>
    %15 = vector.multi_reduction <add>, %14, %cst [1, 2] : vector<1x16x128xf32> to vector<1xf32>
    %16 = vector.shape_cast %15 : vector<1xf32> to vector<1x1x1xf32>
    %17 = vector.extract %16[0, 0, 0] : f32 from vector<1x1x1xf32>
    %18 = vector.extract_strided_slice %8 {offsets = [1, 0, 0], sizes = [1, 16, 128], strides = [1, 1, 1]} : vector<3x16x128xf32> to vector<1x16x128xf32>
    %19 = vector.shape_cast %18 : vector<1x16x128xf32> to vector<16x128xf32>
    %20 = arith.subf %19, %9 : vector<16x128xf32>
    %21 = arith.mulf %20, %20 : vector<16x128xf32>
    %22 = vector.shape_cast %21 : vector<16x128xf32> to vector<1x16x128xf32>
    %cst_8 = arith.constant dense<0.000000e+00> : vector<1xf32>
    %23 = vector.multi_reduction <add>, %22, %cst_8 [1, 2] : vector<1x16x128xf32> to vector<1xf32>
    %24 = vector.shape_cast %23 : vector<1xf32> to vector<1x1x1xf32>
    %25 = vector.extract %24[0, 0, 0] : f32 from vector<1x1x1xf32>
    %26 = arith.cmpf olt, %25, %17 : f32
    %c1_i32 = arith.constant 1 : i32
    %c0_i32_9 = arith.constant 0 : i32
    %27 = arith.select %26, %c1_i32, %c0_i32_9 : i32
    %28 = arith.select %26, %25, %17 : f32
    %29 = vector.extract_strided_slice %8 {offsets = [2, 0, 0], sizes = [1, 16, 128], strides = [1, 1, 1]} : vector<3x16x128xf32> to vector<1x16x128xf32>
    %30 = vector.shape_cast %29 : vector<1x16x128xf32> to vector<16x128xf32>
    %31 = arith.subf %30, %9 : vector<16x128xf32>
    %32 = arith.mulf %31, %31 : vector<16x128xf32>
    %33 = vector.shape_cast %32 : vector<16x128xf32> to vector<1x16x128xf32>
    %cst_10 = arith.constant dense<0.000000e+00> : vector<1xf32>
    %34 = vector.multi_reduction <add>, %33, %cst_10 [1, 2] : vector<1x16x128xf32> to vector<1xf32>
    %35 = vector.shape_cast %34 : vector<1xf32> to vector<1x1x1xf32>
    %36 = vector.extract %35[0, 0, 0] : f32 from vector<1x1x1xf32>
    %37 = arith.cmpf olt, %36, %28 : f32
    %c2_i32 = arith.constant 2 : i32
    %38 = arith.select %37, %c2_i32, %27 : i32
    %c0_i32_11 = arith.constant 0 : i32
    %39 = arith.cmpi eq, %arg0, %c0_i32_11 : i32
    %c0_12 = arith.constant 0 : index
    %40 = memref.load %arg1[%c0_12] : memref<1xi32, #tpu.memory_space<smem>>
    %41 = arith.select %39, %40, %38 : i32
    %cst_13 = arith.constant 0.000000e+00 : f32
    %42 = vector.broadcast %cst_13 : f32 to vector<16x128xf32>
    %43 = vector.extract_strided_slice %8 {offsets = [0, 0, 0], sizes = [1, 16, 128], strides = [1, 1, 1]} : vector<3x16x128xf32> to vector<1x16x128xf32>
    %44 = vector.shape_cast %43 : vector<1x16x128xf32> to vector<16x128xf32>
    %c0_i32_14 = arith.constant 0 : i32
    %45 = arith.cmpi eq, %41, %c0_i32_14 : i32
    %46 = arith.extui %45 : i1 to i32
    %47 = arith.sitofp %46 : i32 to f32
    %48 = vector.broadcast %47 : f32 to vector<16x128xf32>
    %49 = arith.mulf %44, %48 : vector<16x128xf32>
    %50 = arith.addf %42, %49 : vector<16x128xf32>
    %51 = vector.extract_strided_slice %8 {offsets = [1, 0, 0], sizes = [1, 16, 128], strides = [1, 1, 1]} : vector<3x16x128xf32> to vector<1x16x128xf32>
    %52 = vector.shape_cast %51 : vector<1x16x128xf32> to vector<16x128xf32>
    %c1_i32_15 = arith.constant 1 : i32
    %53 = arith.cmpi eq, %41, %c1_i32_15 : i32
    %54 = arith.extui %53 : i1 to i32
    %55 = arith.sitofp %54 : i32 to f32
    %56 = vector.broadcast %55 : f32 to vector<16x128xf32>
    %57 = arith.mulf %52, %56 : vector<16x128xf32>
    %58 = arith.addf %50, %57 : vector<16x128xf32>
    %59 = vector.extract_strided_slice %8 {offsets = [2, 0, 0], sizes = [1, 16, 128], strides = [1, 1, 1]} : vector<3x16x128xf32> to vector<1x16x128xf32>
    %60 = vector.shape_cast %59 : vector<1x16x128xf32> to vector<16x128xf32>
    %c2_i32_16 = arith.constant 2 : i32
    %61 = arith.cmpi eq, %41, %c2_i32_16 : i32
    %62 = arith.extui %61 : i1 to i32
    %63 = arith.sitofp %62 : i32 to f32
    %64 = vector.broadcast %63 : f32 to vector<16x128xf32>
    %65 = arith.mulf %60, %64 : vector<16x128xf32>
    %66 = arith.addf %58, %65 : vector<16x128xf32>
    %67 = tpu.iota {dimensions = array<i32: 1>} : vector<16x128xi32>
    %68 = tpu.iota {dimensions = array<i32: 0>} : vector<16x128xi32>
    %c2_i32_17 = arith.constant 2 : i32
    %69 = tpu.dynamic_rotate %66 by %c2_i32_17 dim 1 : vector<16x128xf32>, i32 -> vector<16x128xf32>
    %c2_i32_18 = arith.constant 2 : i32
    %70 = vector.broadcast %c2_i32_18 : i32 to vector<16x128xi32>
    %71 = arith.cmpi sge, %67, %70 : vector<16x128xi32>
    %cst_19 = arith.constant 0.000000e+00 : f32
    %72 = vector.broadcast %cst_19 : f32 to vector<16x128xf32>
    %73 = arith.select %71, %69, %72 : vector<16x128xi1>, vector<16x128xf32>
    %74 = arith.maximumf %66, %73 : vector<16x128xf32>
    %c1_i32_20 = arith.constant 1 : i32
    %75 = tpu.dynamic_rotate %66 by %c1_i32_20 dim 1 : vector<16x128xf32>, i32 -> vector<16x128xf32>
    %c1_i32_21 = arith.constant 1 : i32
    %76 = vector.broadcast %c1_i32_21 : i32 to vector<16x128xi32>
    %77 = arith.cmpi sge, %67, %76 : vector<16x128xi32>
    %cst_22 = arith.constant 0.000000e+00 : f32
    %78 = vector.broadcast %cst_22 : f32 to vector<16x128xf32>
    %79 = arith.select %77, %75, %78 : vector<16x128xi1>, vector<16x128xf32>
    %80 = arith.maximumf %74, %79 : vector<16x128xf32>
    %c127_i32 = arith.constant 127 : i32
    %81 = tpu.dynamic_rotate %66 by %c127_i32 dim 1 : vector<16x128xf32>, i32 -> vector<16x128xf32>
    %c127_i32_23 = arith.constant 127 : i32
    %82 = vector.broadcast %c127_i32_23 : i32 to vector<16x128xi32>
    %83 = arith.cmpi slt, %67, %82 : vector<16x128xi32>
    %cst_24 = arith.constant 0.000000e+00 : f32
    %84 = vector.broadcast %cst_24 : f32 to vector<16x128xf32>
    %85 = arith.select %83, %81, %84 : vector<16x128xi1>, vector<16x128xf32>
    %86 = arith.maximumf %80, %85 : vector<16x128xf32>
    %c126_i32 = arith.constant 126 : i32
    %87 = tpu.dynamic_rotate %66 by %c126_i32 dim 1 : vector<16x128xf32>, i32 -> vector<16x128xf32>
    %c126_i32_25 = arith.constant 126 : i32
    %88 = vector.broadcast %c126_i32_25 : i32 to vector<16x128xi32>
    %89 = arith.cmpi slt, %67, %88 : vector<16x128xi32>
    %cst_26 = arith.constant 0.000000e+00 : f32
    %90 = vector.broadcast %cst_26 : f32 to vector<16x128xf32>
    %91 = arith.select %89, %87, %90 : vector<16x128xi1>, vector<16x128xf32>
    %92 = arith.maximumf %86, %91 : vector<16x128xf32>
    %c2_i32_27 = arith.constant 2 : i32
    %93 = tpu.dynamic_rotate %92 by %c2_i32_27 dim 0 : vector<16x128xf32>, i32 -> vector<16x128xf32>
    %c2_i32_28 = arith.constant 2 : i32
    %94 = vector.broadcast %c2_i32_28 : i32 to vector<16x128xi32>
    %95 = arith.cmpi sge, %68, %94 : vector<16x128xi32>
    %cst_29 = arith.constant 0.000000e+00 : f32
    %96 = vector.broadcast %cst_29 : f32 to vector<16x128xf32>
    %97 = arith.select %95, %93, %96 : vector<16x128xi1>, vector<16x128xf32>
    %98 = arith.maximumf %92, %97 : vector<16x128xf32>
    %c1_i32_30 = arith.constant 1 : i32
    %99 = tpu.dynamic_rotate %92 by %c1_i32_30 dim 0 : vector<16x128xf32>, i32 -> vector<16x128xf32>
    %c1_i32_31 = arith.constant 1 : i32
    %100 = vector.broadcast %c1_i32_31 : i32 to vector<16x128xi32>
    %101 = arith.cmpi sge, %68, %100 : vector<16x128xi32>
    %cst_32 = arith.constant 0.000000e+00 : f32
    %102 = vector.broadcast %cst_32 : f32 to vector<16x128xf32>
    %103 = arith.select %101, %99, %102 : vector<16x128xi1>, vector<16x128xf32>
    %104 = arith.maximumf %98, %103 : vector<16x128xf32>
    %c15_i32 = arith.constant 15 : i32
    %105 = tpu.dynamic_rotate %92 by %c15_i32 dim 0 : vector<16x128xf32>, i32 -> vector<16x128xf32>
    %c15_i32_33 = arith.constant 15 : i32
    %106 = vector.broadcast %c15_i32_33 : i32 to vector<16x128xi32>
    %107 = arith.cmpi slt, %68, %106 : vector<16x128xi32>
    %cst_34 = arith.constant 0.000000e+00 : f32
    %108 = vector.broadcast %cst_34 : f32 to vector<16x128xf32>
    %109 = arith.select %107, %105, %108 : vector<16x128xi1>, vector<16x128xf32>
    %110 = arith.maximumf %104, %109 : vector<16x128xf32>
    %c14_i32 = arith.constant 14 : i32
    %111 = tpu.dynamic_rotate %92 by %c14_i32 dim 0 : vector<16x128xf32>, i32 -> vector<16x128xf32>
    %c14_i32_35 = arith.constant 14 : i32
    %112 = vector.broadcast %c14_i32_35 : i32 to vector<16x128xi32>
    %113 = arith.cmpi slt, %68, %112 : vector<16x128xi32>
    %cst_36 = arith.constant 0.000000e+00 : f32
    %114 = vector.broadcast %cst_36 : f32 to vector<16x128xf32>
    %115 = arith.select %113, %111, %114 : vector<16x128xi1>, vector<16x128xf32>
    %116 = arith.maximumf %110, %115 : vector<16x128xf32>
    %c0_37 = arith.constant 0 : index
    %c0_38 = arith.constant 0 : index
    %c0_39 = arith.constant 0 : index
    %117 = vector.load %arg3[%c0_37, %c0_38, %c0_39] : memref<1x16x128xf32, #tpu.memory_space<vmem>>, vector<1x16x128xf32>
    %118 = vector.shape_cast %117 : vector<1x16x128xf32> to vector<16x128xf32>
    %119 = vector.shape_cast %116 : vector<16x128xf32> to vector<1x16x128xf32>
    tpu.vector_store %arg3[%c0_37, %c0_38, %c0_39], %119 {strides = array<i32>} : memref<1x16x128xf32, #tpu.memory_space<vmem>>, vector<1x16x128xf32>,
    %c0_40 = arith.constant 0 : index
    %c0_41 = arith.constant 0 : index
    %120 = vector.load %arg5[%c0_40, %c0_41] : memref<16x128xf32, #tpu.memory_space<vmem>>, vector<16x128xf32>
    tpu.vector_store %arg5[%c0_40, %c0_41], %116 {strides = array<i32>} : memref<16x128xf32, #tpu.memory_space<vmem>>, vector<16x128xf32>,
    %cst_42 = arith.constant dense<0xFF800000> : vector<128xf32>
    %121 = vector.multi_reduction <maximumf>, %116, %cst_42 [0] : vector<16x128xf32> to vector<128xf32>
    %122 = vector.shape_cast %121 : vector<128xf32> to vector<1x128xf32>
    %cst_43 = arith.constant 0.000000e+00 : f32
    %123 = vector.broadcast %cst_43 : f32 to vector<1x128xf32>
    %124 = arith.cmpf ogt, %122, %123 : vector<1x128xf32>
    %cst_44 = arith.constant dense<0xFF800000> : vector<16xf32>
    %125 = vector.multi_reduction <maximumf>, %116, %cst_44 [1] : vector<16x128xf32> to vector<16xf32>
    %126 = vector.shape_cast %125 : vector<16xf32> to vector<16x1xf32>
    %cst_45 = arith.constant 0.000000e+00 : f32
    %127 = vector.broadcast %cst_45 : f32 to vector<16x1xf32>
    %128 = arith.cmpf ogt, %126, %127 : vector<16x1xf32>
    %129 = tpu.iota {dimensions = array<i32: 1>} : vector<1x128xi32>
    %130 = tpu.iota {dimensions = array<i32: 0>} : vector<16x1xi32>
    %c128_i32 = arith.constant 128 : i32
    %131 = vector.broadcast %c128_i32 : i32 to vector<1x128xi32>
    %132 = arith.select %124, %129, %131 : vector<1x128xi1>, vector<1x128xi32>
    %133 = vector.shape_cast %132 : vector<1x128xi32> to vector<1x1x128xi32>
    %cst_46 = arith.constant dense<2147483647> : vector<1xi32>
    %134 = vector.multi_reduction <minsi>, %133, %cst_46 [1, 2] : vector<1x1x128xi32> to vector<1xi32>
    %135 = vector.shape_cast %134 : vector<1xi32> to vector<1x1x1xi32>
    %136 = vector.extract %135[0, 0, 0] : i32 from vector<1x1x1xi32>
    %c-1_i32 = arith.constant -1 : i32
    %137 = vector.broadcast %c-1_i32 : i32 to vector<1x128xi32>
    %138 = arith.select %124, %129, %137 : vector<1x128xi1>, vector<1x128xi32>
    %139 = vector.shape_cast %138 : vector<1x128xi32> to vector<1x1x128xi32>
    %cst_47 = arith.constant dense<-2147483648> : vector<1xi32>
    %140 = vector.multi_reduction <maxsi>, %139, %cst_47 [1, 2] : vector<1x1x128xi32> to vector<1xi32>
    %141 = vector.shape_cast %140 : vector<1xi32> to vector<1x1x1xi32>
    %142 = vector.extract %141[0, 0, 0] : i32 from vector<1x1x1xi32>
    %c16_i32 = arith.constant 16 : i32
    %143 = vector.broadcast %c16_i32 : i32 to vector<16x1xi32>
    %144 = arith.select %128, %130, %143 : vector<16x1xi1>, vector<16x1xi32>
    %145 = vector.shape_cast %144 : vector<16x1xi32> to vector<1x16x1xi32>
    %cst_48 = arith.constant dense<2147483647> : vector<1xi32>
    %146 = vector.multi_reduction <minsi>, %145, %cst_48 [1, 2] : vector<1x16x1xi32> to vector<1xi32>
    %147 = vector.shape_cast %146 : vector<1xi32> to vector<1x1x1xi32>
    %148 = vector.extract %147[0, 0, 0] : i32 from vector<1x1x1xi32>
    %c-1_i32_49 = arith.constant -1 : i32
    %149 = vector.broadcast %c-1_i32_49 : i32 to vector<16x1xi32>
    %150 = arith.select %128, %130, %149 : vector<16x1xi1>, vector<16x1xi32>
    %151 = vector.shape_cast %150 : vector<16x1xi32> to vector<1x16x1xi32>
    %cst_50 = arith.constant dense<-2147483648> : vector<1xi32>
    %152 = vector.multi_reduction <maxsi>, %151, %cst_50 [1, 2] : vector<1x16x1xi32> to vector<1xi32>
    %153 = vector.shape_cast %152 : vector<1xi32> to vector<1x1x1xi32>
    %154 = vector.extract %153[0, 0, 0] : i32 from vector<1x1x1xi32>
    %155 = vector.shape_cast %116 : vector<16x128xf32> to vector<1x16x128xf32>
    %cst_51 = arith.constant dense<0xFF800000> : vector<1xf32>
    %156 = vector.multi_reduction <maximumf>, %155, %cst_51 [1, 2] : vector<1x16x128xf32> to vector<1xf32>
    %157 = vector.shape_cast %156 : vector<1xf32> to vector<1x1x1xf32>
    %158 = vector.extract %157[0, 0, 0] : f32 from vector<1x1x1xf32>
    %cst_52 = arith.constant 0.000000e+00 : f32
    %159 = arith.cmpf ogt, %158, %cst_52 : f32
    %c0_i32_53 = arith.constant 0 : i32
    %160 = arith.select %159, %136, %c0_i32_53 : i32
    %c0_i32_54 = arith.constant 0 : i32
    %161 = arith.select %159, %148, %c0_i32_54 : i32
    %162 = arith.subi %142, %136 : i32
    %c1_i32_55 = arith.constant 1 : i32
    %163 = arith.addi %162, %c1_i32_55 : i32
    %c0_i32_56 = arith.constant 0 : i32
    %164 = arith.select %159, %163, %c0_i32_56 : i32
    %165 = arith.subi %154, %148 : i32
    %c1_i32_57 = arith.constant 1 : i32
    %166 = arith.addi %165, %c1_i32_57 : i32
    %c0_i32_58 = arith.constant 0 : i32
    %167 = arith.select %159, %166, %c0_i32_58 : i32
    %c0_59 = arith.constant 0 : index
    %168 = memref.load %arg6[%c0_59] : memref<4xi32, #tpu.memory_space<smem>>
    memref.store %160, %arg6[%c0_59] : memref<4xi32, #tpu.memory_space<smem>>
    %c1 = arith.constant 1 : index
    %169 = memref.load %arg6[%c1] : memref<4xi32, #tpu.memory_space<smem>>
    memref.store %161, %arg6[%c1] : memref<4xi32, #tpu.memory_space<smem>>
    %c2 = arith.constant 2 : index
    %170 = memref.load %arg6[%c2] : memref<4xi32, #tpu.memory_space<smem>>
    memref.store %164, %arg6[%c2] : memref<4xi32, #tpu.memory_space<smem>>
    %c3 = arith.constant 3 : index
    %171 = memref.load %arg6[%c3] : memref<4xi32, #tpu.memory_space<smem>>
    memref.store %167, %arg6[%c3] : memref<4xi32, #tpu.memory_space<smem>>
    %c0_i32_60 = arith.constant 0 : i32
    %172 = arith.cmpi eq, %arg0, %c0_i32_60 : i32
    %173 = arith.extui %172 : i1 to i32
    %c0_i32_61 = arith.constant 0 : i32
    %174 = arith.cmpi ne, %173, %c0_i32_61 : i32
    scf.if %174 {
      %c0_62 = arith.constant 0 : index
      %c0_63 = arith.constant 0 : index
      %175 = memref.load %arg4[%c0_62, %c0_63] : memref<4x4xi32, #tpu.memory_space<smem>>
      memref.store %160, %arg4[%c0_62, %c0_63] : memref<4x4xi32, #tpu.memory_space<smem>>
      %c0_64 = arith.constant 0 : index
      %c1_65 = arith.constant 1 : index
      %176 = memref.load %arg4[%c0_64, %c1_65] : memref<4x4xi32, #tpu.memory_space<smem>>
      memref.store %161, %arg4[%c0_64, %c1_65] : memref<4x4xi32, #tpu.memory_space<smem>>
      %c0_66 = arith.constant 0 : index
      %c2_67 = arith.constant 2 : index
      %177 = memref.load %arg4[%c0_66, %c2_67] : memref<4x4xi32, #tpu.memory_space<smem>>
      memref.store %164, %arg4[%c0_66, %c2_67] : memref<4x4xi32, #tpu.memory_space<smem>>
      %c0_68 = arith.constant 0 : index
      %c3_69 = arith.constant 3 : index
      %178 = memref.load %arg4[%c0_68, %c3_69] : memref<4x4xi32, #tpu.memory_space<smem>>
      memref.store %167, %arg4[%c0_68, %c3_69] : memref<4x4xi32, #tpu.memory_space<smem>>
    } else {
    }
    return
  }
  func.func @transform_0(%arg0: i32, %arg1: memref<1xi32, #tpu.memory_space<smem>>) -> (i32, i32, i32, i32) {
    %c0_i32 = arith.constant 0 : i32
    %c0_i32_0 = arith.constant 0 : i32
    %c0_i32_1 = arith.constant 0 : i32
    %c0_i32_2 = arith.constant 0 : i32
    return %arg0, %c0_i32, %c0_i32_0, %c0_i32_1 : i32, i32, i32, i32
  }
  func.func @transform_1(%arg0: i32, %arg1: memref<1xi32, #tpu.memory_space<smem>>) -> (i32, i32, i32) {
    %c0_i32 = arith.constant 0 : i32
    %c0_i32_0 = arith.constant 0 : i32
    %c0_i32_1 = arith.constant 0 : i32
    return %arg0, %c0_i32, %c0_i32_0 : i32, i32, i32
  }
  func.func @transform_2(%arg0: i32, %arg1: memref<1xi32, #tpu.memory_space<smem>>) -> (i32, i32) {
    %c0_i32 = arith.constant 0 : i32
    %c0_i32_0 = arith.constant 0 : i32
    %c0_i32_1 = arith.constant 0 : i32
    return %c0_i32, %c0_i32_0 : i32, i32
  }
}

</mosaic_0001>

<llo_original>
// kernel: tpu_custom_call.1
$region0: #{tpu_custom_call.1}
  #allocation0 [shape = 'u32[]', space=smem, size = 0x4, offset = 0x4, fixed_abs, tag = 'smem constant byte address 0x4 - core index']
  #allocation1 [shape = 'u32[144,128]{1,0:T(1,128)}', space=vmem, size = 0x12000, scoped, tag = 'internal scratch']
  #allocation2 [shape = 'f32[16,128]{1,0:T(8,128)}', space=vmem, size = 0x2000, scoped, tag = 'scratch operand']
  #allocation3 [shape = 's32[4]{0:T(128)}', space=smem, size = 0x200, scoped, tag = 'scratch operand']
  #allocation4 [shape = 's32[1]{0}', space=sflag, size = 0x4, scoped, tag = 'scoped memory for tpu_custom_call.1']
  #allocation5 [shape = 's32[1]{0:T(128)S(6)}', space=smem, size = 0x200, scoped, tag = 'prefetched SMEM operand 0']
  %s0 = inlined_call_operand.<no memory space> [shape: s32[1], index: 0, kind: input, shape index: {}]
  %s1 = inlined_call_operand.hbm [shape: bf16[4,3,16,128], index: 1, kind: input, shape index: {}]
  %s2 = inlined_call_operand.hbm [shape: f32[4,16,128], index: 2, kind: output, shape index: {0}]
  %s3 = inlined_call_operand.hbm [shape: s32[4,4], index: 3, kind: output, shape index: {1}]
  %4 = xla_tuple %s2, %s3
  %s5 = sld [smem:[#allocation0]]
  $region61: #{tpu_custom_call.1} parent=0
    _
  %s7 = ssub.s32 1, %s5
  %s8 = scalar_select 0, %s7, %s5
  %9 = sst [smem:[#allocation5]] %s0
  $region1: #{tpu_custom_call.1} parent=0
    #allocation6 [shape = 'u8[24576]{0}', space=vmem, size = 0x6000, scoped, tag = 'input window, operand 1']
    #allocation7 [shape = 's32[2]{0}', space=sflag, size = 0x8, scoped, tag = 'scoped memory for tpu_custom_call.1']
    #allocation8 [shape = 's32[2]{0}', space=sflag, size = 0x8, scoped, tag = 'scoped memory for tpu_custom_call.1']
    #allocation9 [shape = 's32[2]{0}', space=sflag, size = 0x8, scoped, tag = 'scoped memory for tpu_custom_call.1']
    #allocation10 [shape = 'u8[16384]{0}', space=vmem, size = 0x4000, scoped, tag = 'output window, operand 0']
    #allocation11 [shape = 'u8[2048]{0}', space=smem, size = 0x800, scoped, tag = 'output window, operand 1, single buffered']
    %10 = vsyncpa [#allocation7], 0
    %s11 = scalar_lea.sflag [#allocation7], 1
    %12 = vsyncpa %s11, 0
    %13 = vsyncpa [#allocation8], 0
    %s14 = scalar_lea.sflag [#allocation8], 1
    %15 = vsyncpa %s14, 0
    %16 = vsyncpa [#allocation9], 0
    loop: start=0, step=1, limit=6
    $region2: #{tpu_custom_call.1} parent=1 // loop_pre_header
      _
    $region3: #{tpu_custom_call.1} parent=1 // loop_header
      %s18 = sphi 0, %s22
      %p19 = scmp.ge.s32.totalorder %s18, 6
      %s28 = sphi 0, %s30
      %s31 = sphi 0, %s28
      %s32 = sphi 0, %s31
      %s48 = sphi 0, %s32
      %s54 = sphi 0, %s56
      %s57 = sphi 0, %s54
      %s58 = sphi 0, %s57
      %s74 = sphi 0, %s58
      %s78 = sphi 0, %s78
      %s80 = sphi 0, %s78
      %s81 = sphi 0, %s80
      %s95 = sphi 0, %s81
    $region4: #{tpu_custom_call.1} parent=1 // loop_header_branch
      %21 = sbr.rel (%p19) target = $region8
    $region5: #{tpu_custom_call.1} parent=1 // loop_body
      %s23 = ssub.s32 %s18, 1
      %s24 = ssub.s32 %s18, 2
      %s25 = sadd.s32 %s18, 1
      %s26 = ssub.s32 %s18, %s25
      %p27 = scmp.eq.s32.totalorder %s26, 0
      %s29 = sadd.s32 %s28, 1
      %s30 = scalar_select %p27, %s28, %s29
      %p33 = pneg %p27
      %p34 = scmp.eq.s32.totalorder %s18, 3
      %p35 = por %p33, %p34
      %p36 = scmp.ne.s32.totalorder %s28, %s31
      %p37 = scmp.eq.s32.totalorder %s18, 0
      %p38 = por %p36, %p37
      %p39 = scmp.ne.s32.totalorder %s28, %s31
      %p40 = scmp.eq.s32.totalorder %s23, 3
      %p41 = por %p39, %p40
      %p42 = scmp.ne.s32.totalorder %s31, %s32
      %p43 = scmp.eq.s32.totalorder %s23, 0
      %p44 = por %p42, %p43
      %p45 = scmp.ne.s32.totalorder %s31, %s32
      %p46 = scmp.eq.s32.totalorder %s24, 3
      %p47 = por %p45, %p46
      %p49 = scmp.ne.s32.totalorder %s32, %s48
      %p50 = scmp.eq.s32.totalorder %s24, 0
      %p51 = por %p49, %p50
      %s52 = ssub.s32 %s18, %s25
      %p53 = scmp.eq.s32.totalorder %s52, 0
      %s55 = sadd.s32 %s54, 1
      %s56 = scalar_select %p53, %s54, %s55
      %p59 = pneg %p53
      %p60 = scmp.eq.s32.totalorder %s18, 3
      %p61 = por %p59, %p60
      %p62 = scmp.ne.s32.totalorder %s54, %s57
      %p63 = scmp.eq.s32.totalorder %s18, 0
      %p64 = por %p62, %p63
      %p65 = scmp.ne.s32.totalorder %s54, %s57
      %p66 = scmp.eq.s32.totalorder %s23, 3
      %p67 = por %p65, %p66
      %p68 = scmp.ne.s32.totalorder %s57, %s58
      %p69 = scmp.eq.s32.totalorder %s23, 0
      %p70 = por %p68, %p69
      %p71 = scmp.ne.s32.totalorder %s57, %s58
      %p72 = scmp.eq.s32.totalorder %s24, 3
      %p73 = por %p71, %p72
      %p75 = scmp.ne.s32.totalorder %s58, %s74
      %p76 = scmp.eq.s32.totalorder %s24, 0
      %p77 = por %p75, %p76
      %s79 = sadd.s32 %s78, 1
      %p82 = scmp.eq.s32.totalorder %s18, 3
      %p83 = scmp.ne.s32.totalorder %s78, %s80
      %p84 = scmp.eq.s32.totalorder %s18, 0
      %p85 = por %p83, %p84
      %p86 = scmp.ne.s32.totalorder %s78, %s80
      %p87 = scmp.eq.s32.totalorder %s23, 3
      %p88 = por %p86, %p87
      %p89 = scmp.ne.s32.totalorder %s80, %s81
      %p90 = scmp.eq.s32.totalorder %s23, 0
      %p91 = por %p89, %p90
      %p92 = scmp.ne.s32.totalorder %s80, %s81
      %p93 = scmp.eq.s32.totalorder %s24, 3
      %p94 = por %p92, %p93
      %p96 = scmp.ne.s32.totalorder %s81, %s95
      %p97 = scmp.eq.s32.totalorder %s24, 0
      %p98 = por %p96, %p97
      %p99 = scmp.le.s32.totalorder 1, %s18
      %p100 = scmp.lt.s32.totalorder %s18, 5
      %p101 = pnand %p99, %p100
      %p102 = pneg %p101
      // Predicated region
      $region9: #{tpu_custom_call.1} parent=5 // pred_check
        _
      $region10: #{tpu_custom_call.1} parent=5 // pred_check_branch
        %104 = sbr.rel (%p101) target = $region12
      $region11: #{tpu_custom_call.1} parent=5 // pred_region
        %s105 = ssub.s32 %s18, 1
      $region12: #{tpu_custom_call.1} parent=5 // pred_fallthru
        _
      %p106 = scmp.lt.s32.totalorder %s18, 4
      // Predicated region
      $region13: #{tpu_custom_call.1} parent=5 // pred_check
        %p107 = pneg %p106
      $region14: #{tpu_custom_call.1} parent=5 // pred_check_branch
        %109 = sbr.rel (%p107) target = $region16
      $region15: #{tpu_custom_call.1} parent=5 // pred_region
        // Predicated region
        $region17: #{tpu_custom_call.1} parent=15 // pred_check
          %p110 = pneg %p38
        $region18: #{tpu_custom_call.1} parent=15 // pred_check_branch
          %112 = sbr.rel (%p110) target = $region20
        $region19: #{tpu_custom_call.1} parent=15 // pred_region
          %s113 = sand.u32 %s28, 1
          %s114 = scalar_lea.sflag [#allocation7], %s113
          %s115 = sand.u32 %s28, 1
          %s116 = smul.addr %s115, 24
          %s117 = scalar_lea.vmem [#allocation6], %s116
          %s119 = ssub.s32 384, 384
          %120 = vsyncadd %s114, %s119
          %s121 = smul.addr %s18, 6
          %s122 = smul.addr %s121, 64
          %s123 = scalar_lea.hbm %s1, %s122
          %s124 = sshll.u32 %s117, 4
          %s125 = int_to_ptr.vmem [resolvable:$true] %s124
          %130 = dma.hbm_to_vmem [thread:$0]  %s123, 384, %s125, %s114, 64, 64, 4
        $region20: #{tpu_custom_call.1} parent=15 // pred_fallthru
          _
      $region16: #{tpu_custom_call.1} parent=5 // pred_fallthru
        _
      %p131 = scmp.le.s32.totalorder 1, %s18
      %p132 = scmp.lt.s32.totalorder %s18, 5
      %p133 = pnand %p131, %p132
      %p134 = pneg %p133
      // Predicated region
      $region21: #{tpu_custom_call.1} parent=5 // pred_check
        _
      $region22: #{tpu_custom_call.1} parent=5 // pred_check_branch
        %136 = sbr.rel (%p133) target = $region24
      $region23: #{tpu_custom_call.1} parent=5 // pred_region
        %s137 = ssub.s32 %s18, 1
        %s138 = sand.u32 %s31, 1
        %s139 = scalar_lea.sflag [#allocation7], %s138
        %s140 = sand.u32 %s31, 1
        %s141 = smul.addr %s140, 24
        %s142 = scalar_lea.vmem [#allocation6], %s141
        // Predicated region
        $region25: #{tpu_custom_call.1} parent=23 // pred_check
          %p143 = pneg %p44
        $region26: #{tpu_custom_call.1} parent=23 // pred_check_branch
          %145 = sbr.rel (%p143) target = $region28
        $region27: #{tpu_custom_call.1} parent=23 // pred_region
          %146 = dma.done %s139, 384
        $region28: #{tpu_custom_call.1} parent=23 // pred_fallthru
          _
        %s147 = sand.u32 %s31, 1
        %s148 = scalar_lea.sflag [#allocation7], %s147
        %s149 = sand.u32 %s31, 1
        %s150 = smul.addr %s149, 24
        %s151 = scalar_lea.vmem [#allocation6], %s150
        %p152 = pneg %p44
        %p153 = pneg %p41
        %p154 = pneg %p70
        %p155 = pneg %p67
        %s156 = sand.u32 %s57, 1
        %s157 = scalar_lea.sflag [#allocation8], %s156
        %s158 = sand.u32 %s57, 1
        %s159 = smul.addr %s158, 16
        %s160 = scalar_lea.vmem [#allocation10], %s159
        %p161 = pneg %p91
        %p162 = pneg %p88
        %p163 = scmp.gt.s32.totalorder %s23, 0
        // Predicated region
        $region29: #{tpu_custom_call.1} parent=23 // pred_check
          %p164 = pneg %p163
        $region30: #{tpu_custom_call.1} parent=23 // pred_check_branch
          %166 = sbr.rel (%p164) target = $region32
        $region31: #{tpu_custom_call.1} parent=23 // pred_region
          %s167 = sld [smem:[#allocation3]]
          %s168 = smul.u32 %s23, 128
          %s169 = scalar_lea.smem [#allocation11], %s168
          %170 = sst [smem:[%s169]] %s167
          %s171 = sld [smem:[#allocation3 + $0x1]]
          %s172 = sadd.s32 %s168, 1
          %s173 = scalar_lea.smem [#allocation11], %s172
          %174 = sst [smem:[%s173]] %s171
          %s175 = sld [smem:[#allocation3 + $0x2]]
          %s176 = sadd.s32 %s168, 2
          %s177 = scalar_lea.smem [#allocation11], %s176
          %178 = sst [smem:[%s177]] %s175
          %s179 = sld [smem:[#allocation3 + $0x3]]
          %s180 = sadd.s32 %s168, 3
          %s181 = scalar_lea.smem [#allocation11], %s180
          %182 = sst [smem:[%s181]] %s179
        $region32: #{tpu_custom_call.1} parent=23 // pred_fallthru
          _
        %p183 = scmp.eq.s32.totalorder %s23, 0
        // Predicated region
        $region33: #{tpu_custom_call.1} parent=23 // pred_check
          %p184 = pneg %p183
        $region34: #{tpu_custom_call.1} parent=23 // pred_check_branch
          %186 = sbr.rel (%p184) target = $region36
        $region35: #{tpu_custom_call.1} parent=23 // pred_region
          %187 = vst [vmem:[#allocation2] sm:$0xff] 0.0
          %188 = vst [vmem:[#allocation2 + $0x8] sm:$0xff] 0.0
        $region36: #{tpu_custom_call.1} parent=23 // pred_fallthru
          _
        %v189 = vld [vmem:[%s142] sm:$0xf]
        %v190 = vld [vmem:[%s142 + $0x4] sm:$0xf]
        %v191 = vld [vmem:[%s142 + $0x8] sm:$0xf]
        %v192 = vld [vmem:[%s142 + $0xc] sm:$0xf]
        %v193 = vld [vmem:[%s142 + $0x10] sm:$0xf]
        %v194 = vld [vmem:[%s142 + $0x14] sm:$0xf]
        %v195 = vunpack.c.l.bf16 %v189
        %v196 = vunpack.c.l.bf16 %v190
        %v197 = vunpack.c.l.bf16 %v191
        %v198 = vunpack.c.l.bf16 %v192
        %v199 = vunpack.c.l.bf16 %v193
        %v200 = vunpack.c.l.bf16 %v194
        %v201 = vld [vmem:[#allocation2] sm:$0xff]
        %v202 = vld [vmem:[#allocation2 + $0x8] sm:$0xff]
        %v203 = vsub.f32 %v195, %v201
        %v204 = vsub.f32 %v196, %v202
        %v205 = vmul.f32 %v203, %v203
        %v206 = vmul.f32 %v204, %v204
        %v207 = vadd.f32 %v205, %v206
        %208 = vadd.xlane.f32.xlu0 %v207
        %v209 = vpop.xlane.xlu0 %208
        %v210 = vrot.slane %v209, 4
        %v211 = vadd.f32 %v209, %v210
        %v212 = vrot.slane %v211, 2
        %v213 = vadd.f32 %v211, %v212
        %v214 = vrot.slane %v213, 1
        %v215 = vadd.f32 %v213, %v214
        %s216 = vtos %v215
        %v217 = vsub.f32 %v197, %v201
        %v218 = vsub.f32 %v198, %v202
        %v219 = vmul.f32 %v217, %v217
        %v220 = vmul.f32 %v218, %v218
        %v221 = vadd.f32 %v219, %v220
        %222 = vadd.xlane.f32.xlu0 %v221
        %v223 = vpop.xlane.xlu0 %222
        %v224 = vrot.slane %v223, 4
        %v225 = vadd.f32 %v223, %v224
        %v226 = vrot.slane %v225, 2
        %v227 = vadd.f32 %v225, %v226
        %v228 = vrot.slane %v227, 1
        %v229 = vadd.f32 %v227, %v228
        %s230 = vtos %v229
        %p231 = scmp.lt.f32.partialorder %s230, %s216
        %s232 = scalar_select %p231, 1, 0
        %s233 = scalar_select %p231, %s230, %s216
        %v234 = vsub.f32 %v199, %v201
        %v235 = vsub.f32 %v200, %v202
        %v236 = vmul.f32 %v234, %v234
        %v237 = vmul.f32 %v235, %v235
        %v238 = vadd.f32 %v236, %v237
        %239 = vadd.xlane.f32.xlu0 %v238
        %v240 = vpop.xlane.xlu0 %239
        %v241 = vrot.slane %v240, 4
        %v242 = vadd.f32 %v240, %v241
        %v243 = vrot.slane %v242, 2
        %v244 = vadd.f32 %v242, %v243
        %v245 = vrot.slane %v244, 1
        %v246 = vadd.f32 %v244, %v245
        %s247 = vtos %v246
        %p248 = scmp.lt.f32.partialorder %s247, %s233
        %s249 = scalar_select %p248, 2, %s232
        %s250 = sld [smem:[#allocation5]]
        %s251 = scalar_select %p183, %s250, %s249
        %p252 = scmp.eq.s32.totalorder %s251, 0
        %s253 = scalar_select %p252, 1, 0
        %s254 = scvt.s32.f32 %s253
        %v255 = vstv %s254
        %v256 = vmul.f32 %v195, %v255
        %v257 = vmul.f32 %v196, %v255
        %v258 = vadd.f32 %v256, 0.0
        %v259 = vadd.f32 %v257, 0.0
        %p260 = scmp.eq.s32.totalorder %s251, 1
        %s261 = scalar_select %p260, 1, 0
        %s262 = scvt.s32.f32 %s261
        %v263 = vstv %s262
        %v264 = vmul.f32 %v197, %v263
        %v265 = vmul.f32 %v198, %v263
        %v266 = vadd.f32 %v258, %v264
        %v267 = vadd.f32 %v259, %v265
        %p268 = scmp.eq.s32.totalorder %s251, 2
        %s269 = scalar_select %p268, 1, 0
        %s270 = scvt.s32.f32 %s269
        %v271 = vstv %s270
        %v272 = vmul.f32 %v199, %v271
        %v273 = vmul.f32 %v200, %v271
        %v274 = vadd.f32 %v266, %v272
        %v275 = vadd.f32 %v267, %v273
        %v276 = vlaneseq
        %v277 = vand.u32 %v276, 127
        %v278 = vlaneseq
        %v279 = vshrl.u32 %v278, 7
        %v280 = vadd.s32 %v279, 8
        %281 = vrot.lane.b32.xlu0 %v274, 2
        %v282 = vpop.permute.xlu0 %281
        %283 = vrot.lane.b32.xlu0 %v275, 2
        %v284 = vpop.permute.xlu0 %283
        %vm285 = vcmp.ge.s32.totalorder %v277, 2
        %v286 = vsel %vm285, %v282, 0.0
        %v287 = vsel %vm285, %v284, 0.0
        %v288 = vmax.f32 %v274, %v286
        %v289 = vmax.f32 %v275, %v287
        %290 = vrot.lane.b32.xlu0 %v274, 1
        %v291 = vpop.permute.xlu0 %290
        %292 = vrot.lane.b32.xlu0 %v275, 1
        %v293 = vpop.permute.xlu0 %292
        %vm294 = vcmp.ge.s32.totalorder %v277, 1
        %v295 = vsel %vm294, %v291, 0.0
        %v296 = vsel %vm294, %v293, 0.0
        %v297 = vmax.f32 %v288, %v295
        %v298 = vmax.f32 %v289, %v296
        %299 = vrot.lane.b32.xlu0 %v274, 127
        %v300 = vpop.permute.xlu0 %299
        %301 = vrot.lane.b32.xlu0 %v275, 127
        %v302 = vpop.permute.xlu0 %301
        %vm303 = vcmp.lt.s32.totalorder %v277, 127
        %v304 = vsel %vm303, %v300, 0.0
        %v305 = vsel %vm303, %v302, 0.0
        %v306 = vmax.f32 %v297, %v304
        %v307 = vmax.f32 %v298, %v305
        %308 = vrot.lane.b32.xlu0 %v274, 126
        %v309 = vpop.permute.xlu0 %308
        %310 = vrot.lane.b32.xlu0 %v275, 126
        %v311 = vpop.permute.xlu0 %310
        %vm312 = vcmp.lt.s32.totalorder %v277, 126
        %v313 = vsel %vm312, %v309, 0.0
        %v314 = vsel %vm312, %v311, 0.0
        %v315 = vmax.f32 %v306, %v313
        %v316 = vmax.f32 %v307, %v314
        %v317 = vrot.slane %v315, 6
        %v318 = vrot.slane %v316, 6
        %vm319 = vcmp.lt.s32.totalorder %v279, 2
        %v320 = vsel %vm319, %v317, %v318
        %v321 = vsel %vm319, %v318, %v317
        %vm322 = vcmp.ge.s32.totalorder %v279, 2
        %vm323 = vcmp.ge.s32.totalorder %v280, 2
        %v324 = vsel %vm322, %v321, 0.0
        %v325 = vsel %vm323, %v320, 0.0
        %v326 = vmax.f32 %v315, %v324
        %v327 = vmax.f32 %v316, %v325
        %v328 = vrot.slane %v315, 7
        %v329 = vrot.slane %v316, 7
        %vm330 = vcmp.lt.s32.totalorder %v279, 1
        %v331 = vsel %vm330, %v328, %v329
        %v332 = vsel %vm330, %v329, %v328
        %vm333 = vcmp.ge.s32.totalorder %v279, 1
        %vm334 = vcmp.ge.s32.totalorder %v280, 1
        %v335 = vsel %vm333, %v332, 0.0
        %v336 = vsel %vm334, %v331, 0.0
        %v337 = vmax.f32 %v326, %v335
        %v338 = vmax.f32 %v327, %v336
        %v339 = vrot.slane %v315, 1
        %v340 = vrot.slane %v316, 1
        %vm341 = vcmp.lt.s32.totalorder %v279, 7
        %v342 = vsel %vm341, %v339, %v340
        %v343 = vsel %vm341, %v340, %v339
        %vm344 = vcmp.lt.s32.totalorder %v279, 15
        %vm345 = vcmp.lt.s32.totalorder %v280, 15
        %v346 = vsel %vm344, %v342, 0.0
        %v347 = vsel %vm345, %v343, 0.0
        %v348 = vmax.f32 %v337, %v346
        %v349 = vmax.f32 %v338, %v347
        %v350 = vrot.slane %v315, 2
        %v351 = vrot.slane %v316, 2
        %vm352 = vcmp.lt.s32.totalorder %v279, 6
        %v353 = vsel %vm352, %v350, %v351
        %v354 = vsel %vm352, %v351, %v350
        %vm355 = vcmp.lt.s32.totalorder %v279, 14
        %vm356 = vcmp.lt.s32.totalorder %v280, 14
        %v357 = vsel %vm355, %v353, 0.0
        %v358 = vsel %vm356, %v354, 0.0
        %v359 = vmax.f32 %v348, %v357
        %v360 = vmax.f32 %v349, %v358
        %361 = vst [vmem:[%s160] sm:$0xff] %v359
        %362 = vst [vmem:[%s160 + $0x8] sm:$0xff] %v360
        %363 = vst [vmem:[#allocation2] sm:$0xff] %v359
        %364 = vst [vmem:[#allocation2 + $0x8] sm:$0xff] %v360
        %v365 = vmax.f32 %v359, %v360
        %v366 = vrot.slane %v365, 4
        %v367 = vmax.f32 %v365, %v366
        %v368 = vrot.slane %v367, 2
        %v369 = vmax.f32 %v367, %v368
        %v370 = vrot.slane %v369, 1
        %v371 = vmax.f32 %v369, %v370
        %vm372 = vcmp.gt.f32.partialorder %v371, 0.0
        %373 = vmax.xlane.f32.xlu0 %v359
        %v374 = vpop.xlane.xlu0 %373
        %375 = vmax.xlane.f32.xlu0 %v360
        %v376 = vpop.xlane.xlu0 %375
        %vm377 = vcmp.gt.f32.partialorder %v374, 0.0
        %vm378 = vcmp.gt.f32.partialorder %v376, 0.0
        %v379 = vsel %vm372, %v277, 128
        %v380 = vand.u32 %v379, 65535
        %v381 = vshra.s32 %v379, 16
        %v382 = vcvt.s32.f32 %v380
        %v383 = vcvt.s32.f32 %v381
        %384 = vmin.xlane.f32.xlu0 %v383
        %v385 = vpop.xlane.xlu0 %384
        %vm386 = vcmp.eq.f32.partialorder %v383, %v385
        %v387 = vsel %vm386, %v382, inf
        %388 = vmin.xlane.f32.xlu0 %v387
        %v389 = vpop.xlane.xlu0 %388
        %v390 = vcvt.f32.s32 %v389
        %v391 = vcvt.f32.s32 %v385
        %v392 = vshll.u32 %v391, 16
        %v393 = vadd.s32 %v392, %v390
        %s394 = vtos %v393
        %v395 = vsel %vm372, %v277, 4294967295
        %v396 = vand.u32 %v395, 65535
        %v397 = vshra.s32 %v395, 16
        %v398 = vcvt.s32.f32 %v396
        %v399 = vcvt.s32.f32 %v397
        %400 = vmax.xlane.f32.xlu0 %v399
        %v401 = vpop.xlane.xlu0 %400
        %vm402 = vcmp.eq.f32.partialorder %v399, %v401
        %v403 = vsel %vm402, %v398, -inf
        %404 = vmax.xlane.f32.xlu0 %v403
        %v405 = vpop.xlane.xlu0 %404
        %v406 = vcvt.f32.s32 %v405
        %v407 = vcvt.f32.s32 %v401
        %v408 = vshll.u32 %v407, 16
        %v409 = vadd.s32 %v408, %v406
        %s410 = vtos %v409
        %v411 = vsel %vm377, %v279, 16
        %v412 = vsel %vm378, %v280, 16
        %vm413 = vcmp.lt.s32.totalorder %v411, %v412
        %v414 = vsel %vm413, %v411, %v412
        %v415 = vrot.slane %v414, 4
        %vm416 = vcmp.lt.s32.totalorder %v414, %v415
        %v417 = vsel %vm416, %v414, %v415
        %v418 = vrot.slane %v417, 2
        %vm419 = vcmp.lt.s32.totalorder %v417, %v418
        %v420 = vsel %vm419, %v417, %v418
        %v421 = vrot.slane %v420, 1
        %vm422 = vcmp.lt.s32.totalorder %v420, %v421
        %v423 = vsel %vm422, %v420, %v421
        %s424 = vtos %v423
        %v425 = vsel %vm377, %v279, 4294967295
        %v426 = vsel %vm378, %v280, 4294967295
        %vm427 = vcmp.gt.s32.totalorder %v425, %v426
        %v428 = vsel %vm427, %v425, %v426
        %v429 = vrot.slane %v428, 4
        %vm430 = vcmp.gt.s32.totalorder %v428, %v429
        %v431 = vsel %vm430, %v428, %v429
        %v432 = vrot.slane %v431, 2
        %vm433 = vcmp.gt.s32.totalorder %v431, %v432
        %v434 = vsel %vm433, %v431, %v432
        %v435 = vrot.slane %v434, 1
        %vm436 = vcmp.gt.s32.totalorder %v434, %v435
        %v437 = vsel %vm436, %v434, %v435
        %s438 = vtos %v437
        %439 = vmax.xlane.f32.xlu0 %v365
        %v440 = vpop.xlane.xlu0 %439
        %v441 = vrot.slane %v440, 4
        %v442 = vmax.f32 %v440, %v441
        %v443 = vrot.slane %v442, 2
        %v444 = vmax.f32 %v442, %v443
        %v445 = vrot.slane %v444, 1
        %v446 = vmax.f32 %v444, %v445
        %s447 = vtos %v446
        %p448 = scmp.gt.f32.partialorder %s447, 0.0
        %s449 = scalar_select %p448, %s394, 0
        %s450 = scalar_select %p448, %s424, 0
        %s451 = ssub.s32 %s410, %s394
        %s452 = sadd.s32 %s451, 1
        %s453 = scalar_select %p448, %s452, 0
        %s454 = ssub.s32 %s438, %s424
        %s455 = sadd.s32 %s454, 1
        %s456 = scalar_select %p448, %s455, 0
        %s457 = scalar_lea.smem [#allocation3], 0
        %458 = sst [smem:[%s457]] %s449
        %s459 = scalar_lea.smem [#allocation3], 1
        %460 = sst [smem:[%s459]] %s450
        %s461 = scalar_lea.smem [#allocation3], 2
        %462 = sst [smem:[%s461]] %s453
        %s463 = scalar_lea.smem [#allocation3], 3
        %464 = sst [smem:[%s463]] %s456
        // Predicated region
        $region37: #{tpu_custom_call.1} parent=23 // pred_check
          %p465 = pneg %p183
        $region38: #{tpu_custom_call.1} parent=23 // pred_check_branch
          %467 = sbr.rel (%p465) target = $region40
        $region39: #{tpu_custom_call.1} parent=23 // pred_region
          %s468 = scalar_lea.smem [#allocation11], 0
          %469 = sst [smem:[%s468]] %s449
          %s470 = scalar_lea.smem [#allocation11], 1
          %471 = sst [smem:[%s470]] %s450
          %s472 = scalar_lea.smem [#allocation11], 2
          %473 = sst [smem:[%s472]] %s453
          %s474 = scalar_lea.smem [#allocation11], 3
          %475 = sst [smem:[%s474]] %s456
        $region40: #{tpu_custom_call.1} parent=23 // pred_fallthru
          _
        %s476 = sand.u32 %s57, 1
        %s477 = scalar_lea.sflag [#allocation8], %s476
        %s478 = sand.u32 %s57, 1
        %s479 = smul.addr %s478, 16
        %s480 = scalar_lea.vmem [#allocation10], %s479
        // Predicated region
        $region41: #{tpu_custom_call.1} parent=23 // pred_check
          %p481 = pneg %p67
        $region42: #{tpu_custom_call.1} parent=23 // pred_check_branch
          %483 = sbr.rel (%p481) target = $region44
        $region43: #{tpu_custom_call.1} parent=23 // pred_region
          %s485 = ssub.s32 256, 256
          %486 = vsyncadd %s477, %s485
          %s487 = smul.addr %s23, 2
          %s488 = smul.addr %s487, 128
          %s489 = scalar_lea.hbm %s2, %s488
          %s490 = sshll.u32 %s480, 4
          %s491 = int_to_ptr.vmem [resolvable:$true] %s490
          %496 = dma.vmem_to_hbm [thread:$0]  %s491, 256, %s489, %s477, 128, 128, 8
        $region44: #{tpu_custom_call.1} parent=23 // pred_fallthru
          _
        // Predicated region
        $region45: #{tpu_custom_call.1} parent=23 // pred_check
          %p497 = pneg %p88
        $region46: #{tpu_custom_call.1} parent=23 // pred_check_branch
          %499 = sbr.rel (%p497) target = $region48
        $region47: #{tpu_custom_call.1} parent=23 // pred_region
          %s501 = ssub.s32 64, 64
          %502 = vsyncadd [#allocation9], %s501
          %505 = dma.smem_to_hbm [#allocation11], 64, %s3, [#allocation9]
        $region48: #{tpu_custom_call.1} parent=23 // pred_fallthru
          _
        // Predicated region
        $region49: #{tpu_custom_call.1} parent=23 // pred_check
          %p506 = pneg %p88
        $region50: #{tpu_custom_call.1} parent=23 // pred_check_branch
          %508 = sbr.rel (%p506) target = $region52
        $region51: #{tpu_custom_call.1} parent=23 // pred_region
          %509 = dma.done [#allocation9], 64
        $region52: #{tpu_custom_call.1} parent=23 // pred_fallthru
          _
        %510 = sfence
      $region24: #{tpu_custom_call.1} parent=5 // pred_fallthru
        _
      %p511 = scmp.le.s32.totalorder 2, %s18
      // Predicated region
      $region53: #{tpu_custom_call.1} parent=5 // pred_check
        %p512 = pneg %p511
      $region54: #{tpu_custom_call.1} parent=5 // pred_check_branch
        %514 = sbr.rel (%p512) target = $region56
      $region55: #{tpu_custom_call.1} parent=5 // pred_region
        %s515 = ssub.s32 %s18, 2
        // Predicated region
        $region57: #{tpu_custom_call.1} parent=55 // pred_check
          %p516 = pneg %p73
        $region58: #{tpu_custom_call.1} parent=55 // pred_check_branch
          %518 = sbr.rel (%p516) target = $region60
        $region59: #{tpu_custom_call.1} parent=55 // pred_region
          %s519 = sand.u32 %s58, 1
          %s520 = scalar_lea.sflag [#allocation8], %s519
          %s521 = sand.u32 %s58, 1
          %s522 = smul.addr %s521, 16
          %s523 = scalar_lea.vmem [#allocation10], %s522
          %524 = dma.done %s520, 256
        $region60: #{tpu_custom_call.1} parent=55 // pred_fallthru
          _
      $region56: #{tpu_custom_call.1} parent=5 // pred_fallthru
        _
    $region6: #{tpu_custom_call.1} parent=1 // loop_footer
      %s22 = sadd.s32 1, %s18
    $region7: #{tpu_custom_call.1} parent=1 // loop_footer_branch
      %17 = sbr.rel target = $region3
    $region8: #{tpu_custom_call.1} parent=1 // loop_exit
      _
    %525 = vsyncpa [#allocation7], 1
    %s526 = scalar_lea.sflag [#allocation7], 1
    %527 = vsyncpa %s526, 1
    %528 = vsyncpa [#allocation8], 1
    %s529 = scalar_lea.sflag [#allocation8], 1
    %530 = vsyncpa %s529, 1
    %531 = vsyncpa [#allocation9], 1
    %s532 = scalar_lea.sflag [#allocation9], 1
    %533 = vsyncpa %s532, 1

</llo_original>
